<compile_context>
chip_gen: v5e
topology: v5e:2x2
jax: 0.10.0
libtpu: 0.0.40
codegen_flags: <defaults>
</compile_context>

<pallas_src>
import jax
import jax.numpy as jnp
from jax.experimental import pallas as pl
from jax.experimental.pallas import tpu as pltpu

_LANE = 128          # lane width: last dim padded to a multiple of this
_SUBLANES = 8        # 4 box coords + 1 labels row + 1 scores row + 2 pad rows
_TILE_N = 2048       # lane-dim tile used only when N is large
_GRIDLESS_MAX = 16 * 1024   # up to (8, 16384) u32 = 512 KiB: single VMEM block


def _adapter_kernel(slab_ref, out_ref):
    # Pure bit-exact pass-through of the fused detection slab.
    out_ref[...] = slab_ref[...]


def _pack(boxes, labels, scores, n, n_pad):
    """Fuse the three detection fields into one lane-dense (8, n_pad) u32 slab."""
    boxes_u = jax.lax.bitcast_convert_type(boxes.astype(jnp.float32), jnp.uint32)   # (n, 4)
    labels_u = jax.lax.bitcast_convert_type(labels.astype(jnp.int32), jnp.uint32)   # (n,)
    scores_u = jax.lax.bitcast_convert_type(scores.astype(jnp.float32), jnp.uint32) # (n,)

    rows = jnp.concatenate(
        [
            boxes_u.T,                                  # rows 0..3: x1,y1,x2,y2
            labels_u[None, :],                          # row 4: labels (bits)
            scores_u[None, :],                          # row 5: scores (bits)
            jnp.zeros((_SUBLANES - 6, n), jnp.uint32),  # rows 6..7: sublane pad
        ],
        axis=0,
    )                                                   # (8, n)
    return jnp.pad(rows, ((0, 0), (0, n_pad - n)))      # (8, n_pad) lane-dense


def _unpack(slab, n):
    out_boxes = jax.lax.bitcast_convert_type(slab[0:4, :n].T, jnp.float32)
    out_labels = jax.lax.bitcast_convert_type(slab[4, :n], jnp.int32)
    out_scores = jax.lax.bitcast_convert_type(slab[5, :n], jnp.float32)
    return out_boxes, out_labels, out_scores


def adapter_forward(x):
    """Equivalent of Adapter.forward(x) -> (x[0]['boxes'], x[0]['labels'], x[0]['scores'])."""
    det = x[0]
    boxes = det["boxes"]     # (N, 4) f32
    labels = det["labels"]   # (N,)   i32
    scores = det["scores"]   # (N,)   f32
    n = boxes.shape[0]

    # Empty detection list: pure identity, nothing to launch.
    if n == 0:
        return boxes, labels, scores

    n_pad = max(_LANE, ((n + _LANE - 1) // _LANE) * _LANE)
    slab = _pack(boxes, labels, scores, n, n_pad)

    out_shape = jax.ShapeDtypeStruct((_SUBLANES, n_pad), jnp.uint32)

    if n_pad <= _GRIDLESS_MAX:
        # Tiny slab: single whole-array VMEM block, output aliases the input.
        out = pl.pallas_call(
            _adapter_kernel,
            out_shape=out_shape,
            in_specs=[pl.BlockSpec(memory_space=pltpu.MemorySpace.VMEM)],
            out_specs=pl.BlockSpec(memory_space=pltpu.MemorySpace.VMEM),
            input_output_aliases={0: 0},
        )(slab)
    else:
        # Large N (pre-NMS scale): tile the lane axis so a block never exceeds
        # v7x's smaller VMEM, and let both TensorCores split the copy.
        out = pl.pallas_call(
            _adapter_kernel,
            out_shape=out_shape,
            grid=(pl.cdiv(n_pad, _TILE_N),),
            in_specs=[pl.BlockSpec((_SUBLANES, _TILE_N), lambda i: (0, i))],
            out_specs=pl.BlockSpec((_SUBLANES, _TILE_N), lambda i: (0, i)),
            input_output_aliases={0: 0},
            compiler_params=pltpu.CompilerParams(
                dimension_semantics=("parallel",)
            ),
        )(slab)

    return _unpack(out, n)


if __name__ == "__main__":
    key = jax.random.PRNGKey(0)
    k_boxes, k_labels, k_scores = jax.random.split(key, 3)

    N = 8  # number of detections in the first image
    boxes = jax.random.uniform(k_boxes, (N, 4), dtype=jnp.float32) * 300.0
    labels = jax.random.randint(k_labels, (N,), 0, 91, dtype=jnp.int32)
    scores = jax.random.uniform(k_scores, (N,), dtype=jnp.float32)

    # Mimic torchvision SSDLite output: List[Dict[str, Tensor]]
    x = [{"boxes": boxes, "labels": labels, "scores": scores}]

    out_boxes, out_labels, out_scores = adapter_forward(x)
    jax.block_until_ready((out_boxes, out_labels, out_scores))

    # Sanity: kernel output must equal the reference pass-through exactly.
    assert out_boxes.shape == (N, 4) and out_boxes.dtype == jnp.float32
    assert out_labels.shape == (N,) and out_labels.dtype == jnp.int32
    assert out_scores.shape == (N,) and out_scores.dtype == jnp.float32
    assert bool(jnp.all(out_boxes == boxes))
    assert bool(jnp.all(out_labels == labels))
    assert bool(jnp.all(out_scores == scores))

    print("KERNEL_OK")
</pallas_src>

<mosaic_0001>
module attributes {stable_mosaic.version = 11 : i64} {
  func.func @_adapter_kernel(%arg0: memref<8x128xi32, #tpu.memory_space<vmem>>, %arg1: memref<8x128xi32, #tpu.memory_space<vmem>>) attributes {dimension_semantics = [], scalar_prefetch = 0 : i64, scratch_operands = 0 : i64, tpu.core_type = #tpu.core_type<tc>} {
    %c0 = arith.constant 0 : index
    %c0_0 = arith.constant 0 : index
    %0 = vector.load %arg0[%c0, %c0_0] : memref<8x128xi32, #tpu.memory_space<vmem>>, vector<8x128xi32>
    %c0_1 = arith.constant 0 : index
    %c0_2 = arith.constant 0 : index
    %1 = vector.load %arg1[%c0_1, %c0_2] : memref<8x128xi32, #tpu.memory_space<vmem>>, vector<8x128xi32>
    tpu.vector_store %arg1[%c0_1, %c0_2], %0 {strides = array<i32>} : memref<8x128xi32, #tpu.memory_space<vmem>>, vector<8x128xi32>,
    return
  }
}

</mosaic_0001>

<llo_original>
// kernel: tpu_custom_call.1
$region0: #{tpu_custom_call.1}
  #allocation0 [shape = 'u32[]', space=smem, size = 0x4, offset = 0x4, fixed_abs, tag = 'smem constant byte address 0x4 - core index']
  #allocation1 [shape = 'u32[72,128]{1,0:T(1,128)}', space=vmem, size = 0x9000, scoped, tag = 'internal scratch']
  %s0 = inlined_call_operand.hbm [shape: u32[8,128], index: 0, kind: input, shape index: {}, may-alias: {0,1}]
  %s1 = inlined_call_operand.hbm [shape: u32[8,128], index: 1, kind: output, shape index: {}, may-alias: {0,1}]
  %s2 = sld [smem:[#allocation0]]
  $region18: #{tpu_custom_call.1} parent=0
    _
  %s4 = ssub.s32 1, %s2
  %s5 = scalar_select 0, %s4, %s2
  $region1: #{tpu_custom_call.1} parent=0
    #allocation2 [shape = 'u8[4096]{0}', space=vmem, size = 0x1000, scoped, tag = 'input window, operand 0, single buffered']
    #allocation3 [shape = 's32[1]{0}', space=sflag, size = 0x4, scoped, tag = 'scoped memory for tpu_custom_call.1']
    #allocation4 [shape = 's32[1]{0}', space=sflag, size = 0x4, scoped, tag = 'scoped memory for tpu_custom_call.1']
    #allocation5 [shape = 'u8[4096]{0}', space=vmem, size = 0x1000, scoped, tag = 'output window, operand 0, single buffered']
    %6 = vsyncpa [#allocation3], 0
    %7 = vsyncpa [#allocation4], 0
    // Predicated region
    $region2: #{tpu_custom_call.1} parent=1 // pred_check
      _
    $region3: #{tpu_custom_call.1} parent=1 // pred_check_branch
      %9 = sbr.rel (0) target = $region5
    $region4: #{tpu_custom_call.1} parent=1 // pred_region
      %11 = vsyncadd [#allocation3], 0
      %s13 = sshll.u32 %s0, 4
      %s14 = int_to_ptr.hbm [resolvable:$true] %s13
      %s15 = sshll.u32 [#allocation2], 4
      %s16 = int_to_ptr.vmem [resolvable:$true] %s15
      %18 = dma.hbm_to_vmem [thread:$0]  %s14, 128, %s16, [#allocation3]
    $region5: #{tpu_custom_call.1} parent=1 // pred_fallthru
      _
    // Predicated region
    $region6: #{tpu_custom_call.1} parent=1 // pred_check
      _
    $region7: #{tpu_custom_call.1} parent=1 // pred_check_branch
      %20 = sbr.rel (0) target = $region9
    $region8: #{tpu_custom_call.1} parent=1 // pred_region
      %22 = dma.done [#allocation3], 128
    $region9: #{tpu_custom_call.1} parent=1 // pred_fallthru
      _
    %v23 = vld [vmem:[#allocation2] sm:$0xff]
    %24 = vst [vmem:[#allocation5] sm:$0xff] %v23
    // Predicated region
    $region10: #{tpu_custom_call.1} parent=1 // pred_check
      _
    $region11: #{tpu_custom_call.1} parent=1 // pred_check_branch
      %26 = sbr.rel (0) target = $region13
    $region12: #{tpu_custom_call.1} parent=1 // pred_region
      %28 = vsyncadd [#allocation4], 0
      %s30 = sshll.u32 [#allocation5], 4
      %s31 = int_to_ptr.vmem [resolvable:$true] %s30
      %s32 = sshll.u32 %s1, 4
      %s33 = int_to_ptr.hbm [resolvable:$true] %s32
      %35 = dma.vmem_to_hbm [thread:$0]  %s31, 128, %s33, [#allocation4]
    $region13: #{tpu_custom_call.1} parent=1 // pred_fallthru
      _
    // Predicated region
    $region14: #{tpu_custom_call.1} parent=1 // pred_check
      _
    $region15: #{tpu_custom_call.1} parent=1 // pred_check_branch
      %37 = sbr.rel (0) target = $region17
    $region16: #{tpu_custom_call.1} parent=1 // pred_region
      %39 = dma.done [#allocation4], 128
    $region17: #{tpu_custom_call.1} parent=1 // pred_fallthru
      _
    %40 = vsyncpa [#allocation3], 1
    %41 = vsyncpa [#allocation4], 1

</llo_original>
